<compile_context>
chip_gen: v7x
topology: tpu7x:2x2x1
jax: 0.10.0
libtpu: 0.0.40
codegen_flags: <defaults>
</compile_context>

<pallas_src>
import functools
import math

import jax
import jax.numpy as jnp
from jax.experimental import pallas as pl
from jax.experimental.pallas import tpu as pltpu


def _round_up(x, m):
    return ((x + m - 1) // m) * m


def _largest_dividing_tile(total, want, step=128):
    """Largest multiple of `step` <= want that divides `total` (total % step == 0)."""
    want = max(step, min(want, total))
    want = (want // step) * step
    t = want
    while total % t:
        t -= step
    return t


def _vmem_budget_bytes():
    """Per-core VMEM budget with headroom for Mosaic internal scratch."""
    phys = 64 * 1024 * 1024  # conservative default: v7x per-TC VMEM
    try:
        info = pltpu.get_tpu_info()
        phys = int(getattr(info, "vmem_capacity_bytes", phys)) or phys
    except Exception:
        pass
    return int(min(phys * 3 // 4, 100 * 1024 * 1024))


# ----------------------------------------------------------------------------
# Fused single-pass kernel: logits stay resident in VMEM, only final log-probs
# are written to HBM.
# ----------------------------------------------------------------------------
def _fused_logprobs_kernel(x_ref, w_ref, b_ref, o_ref, logits_sc, m_sc, l_sc, *,
                           num_v):
    j = pl.program_id(1)

    @pl.when(j == 0)
    def _():
        m_sc[...] = jnp.full_like(m_sc, -jnp.inf)
        l_sc[...] = jnp.zeros_like(l_sc)

    @pl.when(j < num_v)
    def _():
        # Phase 1: (tm, d_model) @ (d_model, tn) on the MXU, f32 accumulation.
        logits = (
            jnp.dot(x_ref[...], w_ref[...], preferred_element_type=jnp.float32)
            + b_ref[...]
        )
        logits_sc[j] = logits  # park tile in VMEM (leading-dim index only)

        # Online (flash-style) logsumexp across vocab tiles.
        m_prev = m_sc[...]
        m_new = jnp.maximum(m_prev, jnp.max(logits, axis=-1, keepdims=True))
        l_sc[...] = l_sc[...] * jnp.exp(m_prev - m_new) + jnp.sum(
            jnp.exp(logits - m_new), axis=-1, keepdims=True
        )
        m_sc[...] = m_new

    @pl.when(j >= num_v)
    def _():
        # Phase 2: emit already-normalized log-probs; only this data hits HBM.
        lse = m_sc[...] + jnp.log(l_sc[...])
        o_ref[...] = (logits_sc[j - num_v] - lse).astype(o_ref.dtype)


# ----------------------------------------------------------------------------
# Fallback 2-pass kernels (very large vocab): matmul + online LSE, then normalize.
# ----------------------------------------------------------------------------
def _logits_lse_kernel(x_ref, w_ref, b_ref, logits_ref, lse_ref, m_sc, l_sc):
    j = pl.program_id(1)

    @pl.when(j == 0)
    def _():
        m_sc[...] = jnp.full_like(m_sc, -jnp.inf)
        l_sc[...] = jnp.zeros_like(l_sc)

    logits = (
        jnp.dot(x_ref[...], w_ref[...], preferred_element_type=jnp.float32)
        + b_ref[...]
    )
    logits_ref[...] = logits.astype(logits_ref.dtype)

    m_prev = m_sc[...]
    m_new = jnp.maximum(m_prev, jnp.max(logits, axis=-1, keepdims=True))
    l_sc[...] = l_sc[...] * jnp.exp(m_prev - m_new) + jnp.sum(
        jnp.exp(logits - m_new), axis=-1, keepdims=True
    )
    m_sc[...] = m_new

    @pl.when(j == pl.num_programs(1) - 1)
    def _():
        lse_ref[...] = m_sc[...] + jnp.log(l_sc[...])


def _normalize_kernel(logits_ref, lse_ref, o_ref):
    o_ref[...] = (logits_ref[...].astype(jnp.float32) - lse_ref[...]).astype(o_ref.dtype)


# ----------------------------------------------------------------------------
# Parameter preparation (hoisted out of the per-call forward).
# ----------------------------------------------------------------------------
def prepare_generator_params(w, b, *, compute_dtype=jnp.bfloat16):
    """Cast W to the MXU compute dtype and pad vocab to a multiple of 128, ONCE.

    w: (d_model, vocab); b: (vocab,).
    Returns (w_prepped (d_model, v_pad) compute_dtype, b_prepped (1, v_pad) f32).
    Padded vocab columns carry a -1e30 bias so exp() underflows to 0 and they
    never affect the logsumexp.  Padding is < 128 so every vocab tile always
    contains at least one real column (keeps the online max finite).
    """
    d_model, vocab = w.shape
    v_pad = _round_up(vocab, 128)
    w_p = w.astype(compute_dtype)
    b_p = b.astype(jnp.float32).reshape(1, vocab)
    if v_pad != vocab:
        w_p = jnp.pad(w_p, ((0, 0), (0, v_pad - vocab)))
        b_p = jnp.pad(b_p, ((0, 0), (0, v_pad - vocab)), constant_values=-1e30)
    return w_p, b_p


# ----------------------------------------------------------------------------
# Forward wrapper.
# ----------------------------------------------------------------------------
@functools.partial(jax.jit, static_argnames=("vocab", "tm", "tn", "force_two_pass"))
def generator_forward(x, w_prepped, b_prepped, *, vocab, tm=512, tn=512,
                      force_two_pass=False):
    """log_softmax(x @ W + b, axis=-1)  (matches torch Generator.forward).

    x: (..., d_model) float; w_prepped/b_prepped from prepare_generator_params.
    Returns (..., vocab) float32.
    """
    *lead, d_model = x.shape
    M = int(math.prod(lead)) if lead else 1
    compute_dtype = w_prepped.dtype
    in_b = jnp.dtype(compute_dtype).itemsize
    v_pad = w_prepped.shape[1]
    assert v_pad % 128 == 0 and vocab <= v_pad

    # Sublane packing quantum of the compute dtype (8 for f32, 16 for bf16).
    q = 8 * max(1, 4 // in_b)

    # ---- row tiling: lane/sublane friendly; keep >=2 row blocks for v7x's 2 TCs
    tm_eff = min(_round_up(tm, q), _round_up(M, q))
    if M > q and -(-M // tm_eff) < 2:
        tm_eff = _round_up(-(-M // 2), q)

    # ---- vocab tiling: lane-dense tn that divides the padded vocab ------------
    tn_eff = _largest_dividing_tile(v_pad, _round_up(tn, 128))
    num_v = v_pad // tn_eff

    budget = _vmem_budget_bytes()

    def fused_bytes(tm_):
        return (2 * tm_ * d_model * in_b          # x tile (double-buffered)
                + 2 * d_model * tn_eff * in_b     # W tile (double-buffered)
                + 2 * tn_eff * 4                  # bias tile
                + tm_ * v_pad * 4                 # resident logits scratch
                + 2 * tm_ * tn_eff * 4            # output tile (double-buffered)
                + 4 * tm_ * 4                     # m / l scratch
                + 3 * tm_ * tn_eff * 4)           # Mosaic elementwise temporaries

    tm_fused = tm_eff
    floor = min(tm_eff, 8 * q)
    while fused_bytes(tm_fused) > budget and tm_fused > floor:
        tm_fused = max(floor, _round_up(tm_fused // 2, q))
    use_fused = (not force_two_pass) and fused_bytes(tm_fused) <= budget

    x2 = x.reshape(M, d_model).astype(compute_dtype)

    if use_fused:
        tm_eff = tm_fused
        m_pad = _round_up(M, tm_eff)
        num_m = m_pad // tm_eff
        if m_pad != M:
            x2 = jnp.pad(x2, ((0, m_pad - M), (0, 0)))

        vmem_limit = int(min(budget, max(16 * 1024 * 1024,
                                         fused_bytes(tm_eff) * 5 // 4 + (2 << 20))))
        cost = pl.CostEstimate(
            flops=2 * m_pad * v_pad * d_model,
            transcendentals=m_pad * v_pad,
            bytes_accessed=(m_pad * d_model * in_b
                            + num_m * d_model * v_pad * in_b
                            + v_pad * 4
                            + m_pad * v_pad * 4),
        )

        out = pl.pallas_call(
            functools.partial(_fused_logprobs_kernel, num_v=num_v),
            out_shape=jax.ShapeDtypeStruct((m_pad, v_pad), jnp.float32),
            grid_spec=pltpu.PrefetchScalarGridSpec(
                num_scalar_prefetch=0,
                grid=(num_m, 2 * num_v),
                in_specs=[
                    pl.BlockSpec((tm_eff, d_model), lambda i, j: (i, 0)),
                    # Clamp so W / bias tiles are fetched exactly once per row block.
                    pl.BlockSpec((d_model, tn_eff),
                                 lambda i, j: (0, jnp.minimum(j, num_v - 1))),
                    pl.BlockSpec((1, tn_eff),
                                 lambda i, j: (0, jnp.minimum(j, num_v - 1))),
                ],
                out_specs=pl.BlockSpec(
                    (tm_eff, tn_eff),
                    lambda i, j: (i, jnp.maximum(j - num_v, 0))),
                scratch_shapes=[
                    pltpu.VMEM((num_v, tm_eff, tn_eff), jnp.float32),  # resident logits
                    pltpu.VMEM((tm_eff, 1), jnp.float32),              # running max
                    pltpu.VMEM((tm_eff, 1), jnp.float32),              # running sum-exp
                ],
            ),
            compiler_params=pltpu.CompilerParams(
                dimension_semantics=("parallel", "arbitrary"),
                vmem_limit_bytes=vmem_limit,
            ),
            cost_estimate=cost,
        )(x2, w_prepped, b_prepped)

    else:
        # ---- fallback: 2-pass path for vocabularies too large to keep resident.
        m_pad = _round_up(M, tm_eff)
        num_m = m_pad // tm_eff
        inter_dtype = compute_dtype          # bf16 intermediates halve HBM traffic
        inter_b = jnp.dtype(inter_dtype).itemsize

        def p1_bytes(tn_):
            return (2 * tm_eff * d_model * in_b
                    + 2 * d_model * tn_ * in_b
                    + 2 * tn_ * 4
                    + 2 * tm_eff * tn_ * inter_b
                    + 4 * tm_eff * 4
                    + 3 * tm_eff * tn_ * 4)

        while p1_bytes(tn_eff) > budget and tn_eff > 128:
            tn_eff = _largest_dividing_tile(v_pad, tn_eff - 128)
        num_v = v_pad // tn_eff
        if m_pad != M:
            x2 = jnp.pad(x2, ((0, m_pad - M), (0, 0)))

        vmem_limit1 = int(min(budget, max(16 * 1024 * 1024,
                                          p1_bytes(tn_eff) * 5 // 4 + (2 << 20))))
        cost1 = pl.CostEstimate(
            flops=2 * m_pad * v_pad * d_model,
            transcendentals=m_pad * v_pad,
            bytes_accessed=(m_pad * d_model * in_b
                            + num_m * d_model * v_pad * in_b
                            + v_pad * 4
                            + m_pad * v_pad * inter_b + m_pad * 4),
        )
        logits, lse = pl.pallas_call(
            _logits_lse_kernel,
            out_shape=(
                jax.ShapeDtypeStruct((m_pad, v_pad), inter_dtype),
                jax.ShapeDtypeStruct((m_pad, 1), jnp.float32),
            ),
            grid_spec=pltpu.PrefetchScalarGridSpec(
                num_scalar_prefetch=0,
                grid=(num_m, num_v),
                in_specs=[
                    pl.BlockSpec((tm_eff, d_model), lambda i, j: (i, 0)),
                    pl.BlockSpec((d_model, tn_eff), lambda i, j: (0, j)),
                    pl.BlockSpec((1, tn_eff), lambda i, j: (0, j)),
                ],
                out_specs=(
                    pl.BlockSpec((tm_eff, tn_eff), lambda i, j: (i, j)),
                    pl.BlockSpec((tm_eff, 1), lambda i, j: (i, 0)),
                ),
                scratch_shapes=[
                    pltpu.VMEM((tm_eff, 1), jnp.float32),
                    pltpu.VMEM((tm_eff, 1), jnp.float32),
                ],
            ),
            compiler_params=pltpu.CompilerParams(
                dimension_semantics=("parallel", "arbitrary"),
                vmem_limit_bytes=vmem_limit1,
            ),
            cost_estimate=cost1,
        )(x2, w_prepped, b_prepped)

        # Pass 2: pure HBM-bound normalize with large, lane-dense tiles.
        tn2 = _largest_dividing_tile(v_pad, 2048)
        p2_bytes = 2 * (tm_eff * tn2 * (inter_b + 4) + tm_eff * 4)
        vmem_limit2 = int(min(budget, max(16 * 1024 * 1024, p2_bytes + (2 << 20))))
        aliases = ({0: 0} if jnp.dtype(inter_dtype) == jnp.dtype(jnp.float32) else {})
        cost2 = pl.CostEstimate(
            flops=m_pad * v_pad,
            transcendentals=0,
            bytes_accessed=m_pad * v_pad * (inter_b + 4) + m_pad * 4,
        )
        out = pl.pallas_call(
            _normalize_kernel,
            out_shape=jax.ShapeDtypeStruct((m_pad, v_pad), jnp.float32),
            grid_spec=pltpu.PrefetchScalarGridSpec(
                num_scalar_prefetch=0,
                grid=(m_pad // tm_eff, v_pad // tn2),
                in_specs=[
                    pl.BlockSpec((tm_eff, tn2), lambda i, j: (i, j)),
                    pl.BlockSpec((tm_eff, 1), lambda i, j: (i, 0)),
                ],
                out_specs=pl.BlockSpec((tm_eff, tn2), lambda i, j: (i, j)),
            ),
            compiler_params=pltpu.CompilerParams(
                dimension_semantics=("parallel", "parallel"),
                vmem_limit_bytes=vmem_limit2,
            ),
            cost_estimate=cost2,
            input_output_aliases=aliases,
        )(logits, lse)

    return out[:M, :vocab].reshape(*lead, vocab)


if __name__ == "__main__":
    # Small shapes consistent with the module: (batch, seq, d_model) -> (batch, seq, vocab)
    batch, seq, d_model, vocab = 2, 8, 32, 128

    key = jax.random.PRNGKey(0)
    kx, kw, kb = jax.random.split(key, 3)

    x = jax.random.normal(kx, (batch, seq, d_model), dtype=jnp.float32)
    # Deterministic init mimicking nn.Linear(d_model, vocab): uniform(-1/sqrt(d_model), +1/sqrt(d_model)).
    bound = 1.0 / (d_model ** 0.5)
    w = jax.random.uniform(kw, (d_model, vocab), minval=-bound, maxval=bound,
                           dtype=jnp.float32)
    b = jax.random.uniform(kb, (vocab,), minval=-bound, maxval=bound,
                           dtype=jnp.float32)

    ref_f32 = jax.nn.log_softmax(jnp.einsum("bsd,dv->bsv", x, w) + b, axis=-1)
    ref_bf16 = jax.nn.log_softmax(
        jnp.einsum(
            "bsd,dv->bsv",
            x.astype(jnp.bfloat16).astype(jnp.float32),
            w.astype(jnp.bfloat16).astype(jnp.float32),
        ) + b,
        axis=-1,
    )

    # f32 compute path, fused single-pass kernel: tight check.
    w32, b32 = prepare_generator_params(w, b, compute_dtype=jnp.float32)
    out_f32 = jax.block_until_ready(generator_forward(x, w32, b32, vocab=vocab))
    assert out_f32.shape == (batch, seq, vocab)
    assert jnp.allclose(out_f32, ref_f32, atol=1e-5, rtol=1e-5)

    # Default bf16 compute path (MXU-native), fused kernel; weights prepared once.
    wbf, bbf = prepare_generator_params(w, b)
    out_bf16 = jax.block_until_ready(generator_forward(x, wbf, bbf, vocab=vocab))
    assert out_bf16.shape == (batch, seq, vocab)
    assert jnp.allclose(out_bf16, ref_bf16, atol=1e-3, rtol=1e-3)

    # Exercise the large-vocab 2-pass fallback path as well.
    out_2p = jax.block_until_ready(
        generator_forward(x, w32, b32, vocab=vocab, force_two_pass=True))
    assert jnp.allclose(out_2p, ref_f32, atol=1e-5, rtol=1e-5)
    out_2p_bf = jax.block_until_ready(
        generator_forward(x, wbf, bbf, vocab=vocab, force_two_pass=True))
    assert jnp.allclose(out_2p_bf, ref_bf16, atol=5e-2, rtol=5e-2)

    print("KERNEL_OK")
</pallas_src>

<mosaic_0001>
module attributes {stable_mosaic.version = 11 : i64} {
  func.func @_fused_logprobs_kernel(%arg0: i32, %arg1: i32, %arg2: memref<8x32xf32, #tpu.memory_space<vmem>>, %arg3: memref<32x128xf32, #tpu.memory_space<vmem>>, %arg4: memref<1x128xf32, #tpu.memory_space<vmem>>, %arg5: memref<8x128xf32, #tpu.memory_space<vmem>>, %arg6: memref<1x8x128xf32, #tpu.memory_space<vmem>>, %arg7: memref<8x1xf32, #tpu.memory_space<vmem>>, %arg8: memref<8x1xf32, #tpu.memory_space<vmem>>) attributes {dimension_semantics = [#tpu.dimension_semantics<parallel>, #tpu.dimension_semantics<arbitrary>], iteration_bounds = array<i64: 2, 2>, scalar_prefetch = 0 : i64, scratch_operands = 3 : i64, tpu.core_type = #tpu.core_type<tc>, window_params = [{transform_indices = @transform_0, window_bounds = array<i64: 8, 32>}, {transform_indices = @transform_1, window_bounds = array<i64: 32, 128>}, {transform_indices = @transform_2, window_bounds = array<i64: 1, 128>}, {transform_indices = @transform_3, window_bounds = array<i64: 8, 128>}]} {
    %c0_i32 = arith.constant 0 : i32
    %0 = arith.cmpi eq, %arg1, %c0_i32 : i32
    %1 = arith.extui %0 : i1 to i32
    %c0_i32_0 = arith.constant 0 : i32
    %2 = arith.cmpi ne, %1, %c0_i32_0 : i32
    scf.if %2 {
      %cst = arith.constant 0xFF800000 : f32
      %9 = vector.broadcast %cst : f32 to vector<8x1xf32>
      %c0 = arith.constant 0 : index
      %c0_4 = arith.constant 0 : index
      %10 = vector.load %arg7[%c0, %c0_4] : memref<8x1xf32, #tpu.memory_space<vmem>>, vector<8x1xf32>
      tpu.vector_store %arg7[%c0, %c0_4], %9 {strides = array<i32>} : memref<8x1xf32, #tpu.memory_space<vmem>>, vector<8x1xf32>,
      %cst_5 = arith.constant 0.000000e+00 : f32
      %11 = vector.broadcast %cst_5 : f32 to vector<8x1xf32>
      %c0_6 = arith.constant 0 : index
      %c0_7 = arith.constant 0 : index
      %12 = vector.load %arg8[%c0_6, %c0_7] : memref<8x1xf32, #tpu.memory_space<vmem>>, vector<8x1xf32>
      tpu.vector_store %arg8[%c0_6, %c0_7], %11 {strides = array<i32>} : memref<8x1xf32, #tpu.memory_space<vmem>>, vector<8x1xf32>,
    } else {
    }
    %c1_i32 = arith.constant 1 : i32
    %3 = arith.cmpi slt, %arg1, %c1_i32 : i32
    %4 = arith.extui %3 : i1 to i32
    %c0_i32_1 = arith.constant 0 : i32
    %5 = arith.cmpi ne, %4, %c0_i32_1 : i32
    scf.if %5 {
      %c0 = arith.constant 0 : index
      %c0_4 = arith.constant 0 : index
      %9 = vector.load %arg2[%c0, %c0_4] : memref<8x32xf32, #tpu.memory_space<vmem>>, vector<8x32xf32>
      %c0_5 = arith.constant 0 : index
      %c0_6 = arith.constant 0 : index
      %10 = vector.load %arg3[%c0_5, %c0_6] : memref<32x128xf32, #tpu.memory_space<vmem>>, vector<32x128xf32>
      %cst = arith.constant dense<0.000000e+00> : vector<8x128xf32>
      %11 = tpu.matmul %9, %10, %cst {dimension_numbers = #tpu.dot_dimension_numbers<[1], [0], [0], [1], [0, 0, 1, 1], [], []>} : vector<8x32xf32>, vector<32x128xf32>, vector<8x128xf32> -> vector<8x128xf32>
      %c0_7 = arith.constant 0 : index
      %c0_8 = arith.constant 0 : index
      %12 = vector.load %arg4[%c0_7, %c0_8] : memref<1x128xf32, #tpu.memory_space<vmem>>, vector<1x128xf32>
      %13 = vector.broadcast %12 : vector<1x128xf32> to vector<8x128xf32>
      %14 = arith.addf %11, %13 : vector<8x128xf32>
      %15 = arith.index_cast %arg1 : i32 to index
      %c0_9 = arith.constant 0 : index
      %c0_10 = arith.constant 0 : index
      %16 = vector.load %arg6[%15, %c0_9, %c0_10] : memref<1x8x128xf32, #tpu.memory_space<vmem>>, vector<1x8x128xf32>
      %17 = vector.shape_cast %16 : vector<1x8x128xf32> to vector<8x128xf32>
      %18 = vector.shape_cast %14 : vector<8x128xf32> to vector<1x8x128xf32>
      tpu.vector_store %arg6[%15, %c0_9, %c0_10], %18 {strides = array<i32>} : memref<1x8x128xf32, #tpu.memory_space<vmem>>, vector<1x8x128xf32>,
      %c0_11 = arith.constant 0 : index
      %c0_12 = arith.constant 0 : index
      %19 = vector.load %arg7[%c0_11, %c0_12] : memref<8x1xf32, #tpu.memory_space<vmem>>, vector<8x1xf32>
      %cst_13 = arith.constant dense<0xFF800000> : vector<8xf32>
      %20 = vector.multi_reduction <maximumf>, %14, %cst_13 [1] : vector<8x128xf32> to vector<8xf32>
      %21 = vector.shape_cast %20 : vector<8xf32> to vector<8x1xf32>
      %22 = arith.maximumf %19, %21 : vector<8x1xf32>
      %c0_14 = arith.constant 0 : index
      %c0_15 = arith.constant 0 : index
      %23 = vector.load %arg8[%c0_14, %c0_15] : memref<8x1xf32, #tpu.memory_space<vmem>>, vector<8x1xf32>
      %24 = arith.subf %19, %22 : vector<8x1xf32>
      %25 = math.exp %24 : vector<8x1xf32>
      %26 = arith.mulf %23, %25 : vector<8x1xf32>
      %27 = vector.broadcast %22 : vector<8x1xf32> to vector<8x128xf32>
      %28 = arith.subf %14, %27 : vector<8x128xf32>
      %29 = math.exp %28 : vector<8x128xf32>
      %cst_16 = arith.constant dense<0.000000e+00> : vector<8xf32>
      %30 = vector.multi_reduction <add>, %29, %cst_16 [1] : vector<8x128xf32> to vector<8xf32>
      %31 = vector.shape_cast %30 : vector<8xf32> to vector<8x1xf32>
      %32 = arith.addf %26, %31 : vector<8x1xf32>
      %c0_17 = arith.constant 0 : index
      %c0_18 = arith.constant 0 : index
      %33 = vector.load %arg8[%c0_17, %c0_18] : memref<8x1xf32, #tpu.memory_space<vmem>>, vector<8x1xf32>
      tpu.vector_store %arg8[%c0_17, %c0_18], %32 {strides = array<i32>} : memref<8x1xf32, #tpu.memory_space<vmem>>, vector<8x1xf32>,
      %c0_19 = arith.constant 0 : index
      %c0_20 = arith.constant 0 : index
      %34 = vector.load %arg7[%c0_19, %c0_20] : memref<8x1xf32, #tpu.memory_space<vmem>>, vector<8x1xf32>
      tpu.vector_store %arg7[%c0_19, %c0_20], %22 {strides = array<i32>} : memref<8x1xf32, #tpu.memory_space<vmem>>, vector<8x1xf32>,
    } else {
    }
    %c1_i32_2 = arith.constant 1 : i32
    %6 = arith.cmpi sge, %arg1, %c1_i32_2 : i32
    %7 = arith.extui %6 : i1 to i32
    %c0_i32_3 = arith.constant 0 : i32
    %8 = arith.cmpi ne, %7, %c0_i32_3 : i32
    scf.if %8 {
      %c0 = arith.constant 0 : index
      %c0_4 = arith.constant 0 : index
      %9 = vector.load %arg7[%c0, %c0_4] : memref<8x1xf32, #tpu.memory_space<vmem>>, vector<8x1xf32>
      %c0_5 = arith.constant 0 : index
      %c0_6 = arith.constant 0 : index
      %10 = vector.load %arg8[%c0_5, %c0_6] : memref<8x1xf32, #tpu.memory_space<vmem>>, vector<8x1xf32>
      %11 = math.log %10 : vector<8x1xf32>
      %12 = arith.addf %9, %11 : vector<8x1xf32>
      %c1_i32_7 = arith.constant 1 : i32
      %13 = arith.subi %arg1, %c1_i32_7 : i32
      %14 = arith.index_cast %13 : i32 to index
      %c0_8 = arith.constant 0 : index
      %c0_9 = arith.constant 0 : index
      %15 = vector.load %arg6[%14, %c0_8, %c0_9] : memref<1x8x128xf32, #tpu.memory_space<vmem>>, vector<1x8x128xf32>
      %16 = vector.shape_cast %15 : vector<1x8x128xf32> to vector<8x128xf32>
      %17 = vector.broadcast %12 : vector<8x1xf32> to vector<8x128xf32>
      %18 = arith.subf %16, %17 : vector<8x128xf32>
      %c0_10 = arith.constant 0 : index
      %c0_11 = arith.constant 0 : index
      %19 = vector.load %arg5[%c0_10, %c0_11] : memref<8x128xf32, #tpu.memory_space<vmem>>, vector<8x128xf32>
      tpu.vector_store %arg5[%c0_10, %c0_11], %18 {strides = array<i32>} : memref<8x128xf32, #tpu.memory_space<vmem>>, vector<8x128xf32>,
    } else {
    }
    return
  }
  func.func @transform_0(%arg0: i32, %arg1: i32) -> (i32, i32) {
    %c0_i32 = arith.constant 0 : i32
    %c0_i32_0 = arith.constant 0 : i32
    return %arg0, %c0_i32 : i32, i32
  }
  func.func @transform_1(%arg0: i32, %arg1: i32) -> (i32, i32) {
    %c0_i32 = arith.constant 0 : i32
    %0 = arith.minsi %arg1, %c0_i32 : i32
    %c0_i32_0 = arith.constant 0 : i32
    %c0_i32_1 = arith.constant 0 : i32
    return %c0_i32_0, %0 : i32, i32
  }
  func.func @transform_2(%arg0: i32, %arg1: i32) -> (i32, i32) {
    %c0_i32 = arith.constant 0 : i32
    %0 = arith.minsi %arg1, %c0_i32 : i32
    %c0_i32_0 = arith.constant 0 : i32
    %c0_i32_1 = arith.constant 0 : i32
    return %c0_i32_0, %0 : i32, i32
  }
  func.func @transform_3(%arg0: i32, %arg1: i32) -> (i32, i32) {
    %c1_i32 = arith.constant 1 : i32
    %0 = arith.subi %arg1, %c1_i32 : i32
    %c0_i32 = arith.constant 0 : i32
    %1 = arith.maxsi %0, %c0_i32 : i32
    %c0_i32_0 = arith.constant 0 : i32
    return %arg0, %1 : i32, i32
  }
}

</mosaic_0001>

<llo_original>
// kernel: generator_forward.1
$region0: #{generator_forward.1}
  #allocation0 [shape = 'u32[]', space=smem, size = 0x4, offset = 0x4, fixed_abs, tag = 'smem constant byte address 0x4 - core index']
  #allocation1 [shape = 'u32[144,128]{1,0:T(1,128)}', space=vmem, size = 0x12000, scoped, tag = 'internal scratch']
  #allocation2 [shape = 'f32[1,8,128]{2,1,0:T(8,128)}', space=vmem, size = 0x1000, scoped, tag = 'scratch operand']
  #allocation3 [shape = 'f32[8,1]{1,0:T(8,128)}', space=vmem, size = 0x1000, scoped, tag = 'scratch operand']
  #allocation4 [shape = 'f32[8,1]{1,0:T(8,128)}', space=vmem, size = 0x1000, scoped, tag = 'scratch operand']
  %s0 = inlined_call_operand.hbm [shape: f32[16,32], index: 0, kind: input, shape index: {}]
  %s1 = inlined_call_operand.hbm [shape: f32[32,128], index: 1, kind: input, shape index: {}]
  %s2 = inlined_call_operand.vmem [shape: f32[1,128], index: 2, kind: input, shape index: {}]
  %s3 = inlined_call_operand.hbm [shape: f32[16,128], index: 3, kind: output, shape index: {}]
  %s4 = sld [smem:[#allocation0]]
  $region65: #{generator_forward.1} parent=0
    _
  %s6 = ssub.s32 1, %s4
  %s7 = scalar_select 0, %s6, %s4
  $region1: #{generator_forward.1} parent=0
    #allocation5 [shape = 'u8[8192]{0}', space=vmem, size = 0x2000, scoped, tag = 'input window, operand 0']
    #allocation6 [shape = 's32[2]{0}', space=sflag, size = 0x8, scoped, tag = 'scoped memory for generator_forward.1']
    #allocation7 [shape = 's32[2]{0}', space=sflag, size = 0x8, scoped, tag = 'scoped memory for generator_forward.1']
    #allocation8 [shape = 'u8[32768]{0}', space=vmem, size = 0x8000, scoped, tag = 'input window, operand 1']
    #allocation9 [shape = 's32[2]{0}', space=sflag, size = 0x8, scoped, tag = 'scoped memory for generator_forward.1']
    #allocation10 [shape = 'u8[8192]{0}', space=vmem, size = 0x2000, scoped, tag = 'output window, operand 0']
    %8 = vsyncpa [#allocation6], 0
    %s9 = scalar_lea.sflag [#allocation6], 1
    %10 = vsyncpa %s9, 0
    %11 = vsyncpa [#allocation9], 0
    %s12 = scalar_lea.sflag [#allocation9], 1
    %13 = vsyncpa %s12, 0
    %14 = vsyncpa [#allocation7], 0
    %s15 = scalar_lea.sflag [#allocation7], 1
    %16 = vsyncpa %s15, 0
    loop: start=0, step=1, limit=6
    $region2: #{generator_forward.1} parent=1 // loop_pre_header
      _
    $region3: #{generator_forward.1} parent=1 // loop_header
      %s18 = sphi 0, %s22
      %p19 = scmp.ge.s32.totalorder %s18, 6
      %s25 = sphi 0, %s37
      %s26 = sphi 0, %s33
      %s27 = sphi 0, %s25
      %s28 = sphi 0, %s26
      %s29 = sphi 0, %s27
      %s30 = sphi 0, %s28
      %s40 = sphi 0, %s42
      %s43 = sphi 0, %s40
      %s44 = sphi 0, %s43
      %s60 = sphi 0, %s44
      %s70 = sphi 0, %s72
      %s73 = sphi 0, %s70
      %s74 = sphi 0, %s73
      %s90 = sphi 0, %s74
      %s100 = sphi 0, %s102
      %s103 = sphi 0, %s100
      %s104 = sphi 0, %s103
      %s120 = sphi 0, %s104
      %s134 = sphi 0, %s136
      %s137 = sphi 0, %s134
      %s138 = sphi 0, %s137
      %s154 = sphi 0, %s138
    $region4: #{generator_forward.1} parent=1 // loop_header_branch
      %21 = sbr.rel (%p19) target = $region8
    $region5: #{generator_forward.1} parent=1 // loop_body
      %s23 = ssub.s32 %s18, 1
      %s24 = ssub.s32 %s18, 2
      %s31 = sadd.s32 1, %s26
      %p32 = scmp.ge.s32.totalorder %s31, 2
      %s33 = scalar_select %p32, 0, %s31
      %s34 = sadd.s32 1, %s25
      %s35 = scalar_select %p32, %s34, %s25
      %p36 = scmp.ge.s32.totalorder %s35, 2
      %s37 = scalar_select %p36, 0, %s35
      %s38 = ssub.s32 %s25, %s37
      %p39 = scmp.eq.s32.totalorder %s38, 0
      %s41 = sadd.s32 %s40, 1
      %s42 = scalar_select %p39, %s40, %s41
      %p45 = pneg %p39
      %p46 = scmp.eq.s32.totalorder %s18, 3
      %p47 = por %p45, %p46
      %p48 = scmp.ne.s32.totalorder %s40, %s43
      %p49 = scmp.eq.s32.totalorder %s18, 0
      %p50 = por %p48, %p49
      %p51 = scmp.ne.s32.totalorder %s40, %s43
      %p52 = scmp.eq.s32.totalorder %s23, 3
      %p53 = por %p51, %p52
      %p54 = scmp.ne.s32.totalorder %s43, %s44
      %p55 = scmp.eq.s32.totalorder %s23, 0
      %p56 = por %p54, %p55
      %p57 = scmp.ne.s32.totalorder %s43, %s44
      %p58 = scmp.eq.s32.totalorder %s24, 3
      %p59 = por %p57, %p58
      %p61 = scmp.ne.s32.totalorder %s44, %s60
      %p62 = scmp.eq.s32.totalorder %s24, 0
      %p63 = por %p61, %p62
      %p64 = scmp.lt.s32.totalorder %s26, 0
      %s65 = scalar_select %p64, %s26, 0
      %p66 = scmp.lt.s32.totalorder %s33, 0
      %s67 = scalar_select %p66, %s33, 0
      %s68 = ssub.s32 %s65, %s67
      %p69 = scmp.eq.s32.totalorder %s68, 0
      %s71 = sadd.s32 %s70, 1
      %s72 = scalar_select %p69, %s70, %s71
      %p75 = pneg %p69
      %p76 = scmp.eq.s32.totalorder %s18, 3
      %p77 = por %p75, %p76
      %p78 = scmp.ne.s32.totalorder %s70, %s73
      %p79 = scmp.eq.s32.totalorder %s18, 0
      %p80 = por %p78, %p79
      %p81 = scmp.ne.s32.totalorder %s70, %s73
      %p82 = scmp.eq.s32.totalorder %s23, 3
      %p83 = por %p81, %p82
      %p84 = scmp.ne.s32.totalorder %s73, %s74
      %p85 = scmp.eq.s32.totalorder %s23, 0
      %p86 = por %p84, %p85
      %p87 = scmp.ne.s32.totalorder %s73, %s74
      %p88 = scmp.eq.s32.totalorder %s24, 3
      %p89 = por %p87, %p88
      %p91 = scmp.ne.s32.totalorder %s74, %s90
      %p92 = scmp.eq.s32.totalorder %s24, 0
      %p93 = por %p91, %p92
      %p94 = scmp.lt.s32.totalorder %s26, 0
      %s95 = scalar_select %p94, %s26, 0
      %p96 = scmp.lt.s32.totalorder %s33, 0
      %s97 = scalar_select %p96, %s33, 0
      %s98 = ssub.s32 %s95, %s97
      %p99 = scmp.eq.s32.totalorder %s98, 0
      %s101 = sadd.s32 %s100, 1
      %s102 = scalar_select %p99, %s100, %s101
      %p105 = pneg %p99
      %p106 = scmp.eq.s32.totalorder %s18, 3
      %p107 = por %p105, %p106
      %p108 = scmp.ne.s32.totalorder %s100, %s103
      %p109 = scmp.eq.s32.totalorder %s18, 0
      %p110 = por %p108, %p109
      %p111 = scmp.ne.s32.totalorder %s100, %s103
      %p112 = scmp.eq.s32.totalorder %s23, 3
      %p113 = por %p111, %p112
      %p114 = scmp.ne.s32.totalorder %s103, %s104
      %p115 = scmp.eq.s32.totalorder %s23, 0
      %p116 = por %p114, %p115
      %p117 = scmp.ne.s32.totalorder %s103, %s104
      %p118 = scmp.eq.s32.totalorder %s24, 3
      %p119 = por %p117, %p118
      %p121 = scmp.ne.s32.totalorder %s104, %s120
      %p122 = scmp.eq.s32.totalorder %s24, 0
      %p123 = por %p121, %p122
      %s124 = ssub.s32 %s26, 1
      %p125 = scmp.gt.s32.totalorder %s124, 0
      %s126 = scalar_select %p125, %s124, 0
      %s127 = ssub.s32 %s33, 1
      %p128 = scmp.gt.s32.totalorder %s127, 0
      %s129 = scalar_select %p128, %s127, 0
      %s130 = ssub.s32 %s25, %s37
      %s131 = ssub.s32 %s126, %s129
      %s132 = sor.u32 %s130, %s131
      %p133 = scmp.eq.s32.totalorder %s132, 0
      %s135 = sadd.s32 %s134, 1
      %s136 = scalar_select %p133, %s134, %s135
      %p139 = pneg %p133
      %p140 = scmp.eq.s32.totalorder %s18, 3
      %p141 = por %p139, %p140
      %p142 = scmp.ne.s32.totalorder %s134, %s137
      %p143 = scmp.eq.s32.totalorder %s18, 0
      %p144 = por %p142, %p143
      %p145 = scmp.ne.s32.totalorder %s134, %s137
      %p146 = scmp.eq.s32.totalorder %s23, 3
      %p147 = por %p145, %p146
      %p148 = scmp.ne.s32.totalorder %s137, %s138
      %p149 = scmp.eq.s32.totalorder %s23, 0
      %p150 = por %p148, %p149
      %p151 = scmp.ne.s32.totalorder %s137, %s138
      %p152 = scmp.eq.s32.totalorder %s24, 3
      %p153 = por %p151, %p152
      %p155 = scmp.ne.s32.totalorder %s138, %s154
      %p156 = scmp.eq.s32.totalorder %s24, 0
      %p157 = por %p155, %p156
      %p158 = scmp.le.s32.totalorder 1, %s18
      %p159 = scmp.lt.s32.totalorder %s18, 5
      %p160 = pnand %p158, %p159
      %p161 = pneg %p160
      // Predicated region
      $region9: #{generator_forward.1} parent=5 // pred_check
        _
      $region10: #{generator_forward.1} parent=5 // pred_check_branch
        %163 = sbr.rel (%p160) target = $region12
      $region11: #{generator_forward.1} parent=5 // pred_region
        %s164 = ssub.s32 %s18, 1
      $region12: #{generator_forward.1} parent=5 // pred_fallthru
        _
      %p165 = scmp.lt.s32.totalorder %s18, 4
      // Predicated region
      $region13: #{generator_forward.1} parent=5 // pred_check
        %p166 = pneg %p165
      $region14: #{generator_forward.1} parent=5 // pred_check_branch
        %168 = sbr.rel (%p166) target = $region16
      $region15: #{generator_forward.1} parent=5 // pred_region
        // Predicated region
        $region17: #{generator_forward.1} parent=15 // pred_check
          %p169 = pneg %p50
        $region18: #{generator_forward.1} parent=15 // pred_check_branch
          %171 = sbr.rel (%p169) target = $region20
        $region19: #{generator_forward.1} parent=15 // pred_region
          %s172 = sand.u32 %s40, 1
          %s173 = scalar_lea.sflag [#allocation6], %s172
          %s174 = sand.u32 %s40, 1
          %s175 = smul.addr %s174, 8
          %s176 = scalar_lea.vmem [#allocation5], %s175
          %s178 = ssub.s32 128, 128
          %179 = vsyncadd %s173, %s178
          %s180 = smul.addr %s25, 128
          %s181 = scalar_lea.hbm %s0, %s180
          %s183 = sshll.u32 %s176, 4
          %s184 = int_to_ptr.vmem [resolvable:$true] %s183
          %186 = dma.hbm_to_vmem [thread:$0]  %s181, 128, %s184, %s173
        $region20: #{generator_forward.1} parent=15 // pred_fallthru
          _
        // Predicated region
        $region21: #{generator_forward.1} parent=15 // pred_check
          %p187 = pneg %p80
        $region22: #{generator_forward.1} parent=15 // pred_check_branch
          %189 = sbr.rel (%p187) target = $region24
        $region23: #{generator_forward.1} parent=15 // pred_region
          %s190 = sand.u32 %s70, 1
          %s191 = scalar_lea.sflag [#allocation9], %s190
          %s192 = sand.u32 %s70, 1
          %s193 = smul.addr %s192, 32
          %s194 = scalar_lea.vmem [#allocation8], %s193
          %p195 = scmp.lt.s32.totalorder %s26, 0
          %s196 = scalar_select %p195, %s26, 0
          %s198 = ssub.s32 512, 512
          %199 = vsyncadd %s191, %s198
          %s200 = smul.addr %s196, 128
          %s201 = scalar_lea.hbm %s1, %s200
          %s202 = sshll.u32 %s194, 4
          %s203 = int_to_ptr.vmem [resolvable:$true] %s202
          %208 = dma.hbm_to_vmem [thread:$0]  %s201, 512, %s203, %s191, 128, 128, 8
        $region24: #{generator_forward.1} parent=15 // pred_fallthru
          _
        // Predicated region
        $region25: #{generator_forward.1} parent=15 // pred_check
          %p209 = pneg %p110
        $region26: #{generator_forward.1} parent=15 // pred_check_branch
          %211 = sbr.rel (%p209) target = $region28
        $region27: #{generator_forward.1} parent=15 // pred_region
          %p212 = scmp.lt.s32.totalorder %s26, 0
          %s213 = scalar_select %p212, %s26, 0
          %p214 = scmp.lt.s32.totalorder %s213, 0
          %s215 = scalar_select %p214, %s213, 0
          %s216 = scalar_lea.vmem %s2, %s215
          %p217 = scmp.lt.s32.totalorder %s26, 0
          %s218 = scalar_select %p217, %s26, 0
        $region28: #{generator_forward.1} parent=15 // pred_fallthru
          _
      $region16: #{generator_forward.1} parent=5 // pred_fallthru
        _
      %p219 = scmp.le.s32.totalorder 1, %s18
      %p220 = scmp.lt.s32.totalorder %s18, 5
      %p221 = pnand %p219, %p220
      %p222 = pneg %p221
      // Predicated region
      $region29: #{generator_forward.1} parent=5 // pred_check
        _
      $region30: #{generator_forward.1} parent=5 // pred_check_branch
        %224 = sbr.rel (%p221) target = $region32
      $region31: #{generator_forward.1} parent=5 // pred_region
        %s225 = ssub.s32 %s18, 1
        %s226 = sand.u32 %s43, 1
        %s227 = scalar_lea.sflag [#allocation6], %s226
        %s228 = sand.u32 %s43, 1
        %s229 = smul.addr %s228, 8
        %s230 = scalar_lea.vmem [#allocation5], %s229
        // Predicated region
        $region33: #{generator_forward.1} parent=31 // pred_check
          %p231 = pneg %p56
        $region34: #{generator_forward.1} parent=31 // pred_check_branch
          %233 = sbr.rel (%p231) target = $region36
        $region35: #{generator_forward.1} parent=31 // pred_region
          %234 = dma.done %s227, 128
        $region36: #{generator_forward.1} parent=31 // pred_fallthru
          _
        %s235 = sand.u32 %s73, 1
        %s236 = scalar_lea.sflag [#allocation9], %s235
        %s237 = sand.u32 %s73, 1
        %s238 = smul.addr %s237, 32
        %s239 = scalar_lea.vmem [#allocation8], %s238
        // Predicated region
        $region37: #{generator_forward.1} parent=31 // pred_check
          %p240 = pneg %p86
        $region38: #{generator_forward.1} parent=31 // pred_check_branch
          %242 = sbr.rel (%p240) target = $region40
        $region39: #{generator_forward.1} parent=31 // pred_region
          %243 = dma.done %s236, 512
        $region40: #{generator_forward.1} parent=31 // pred_fallthru
          _
        %s244 = sand.u32 %s43, 1
        %s245 = scalar_lea.sflag [#allocation6], %s244
        %s246 = sand.u32 %s43, 1
        %s247 = smul.addr %s246, 8
        %s248 = scalar_lea.vmem [#allocation5], %s247
        %p249 = pneg %p56
        %p250 = pneg %p53
        %s251 = sand.u32 %s73, 1
        %s252 = scalar_lea.sflag [#allocation9], %s251
        %s253 = sand.u32 %s73, 1
        %s254 = smul.addr %s253, 32
        %s255 = scalar_lea.vmem [#allocation8], %s254
        %p256 = pneg %p86
        %p257 = pneg %p83
        %p258 = scmp.lt.s32.totalorder %s28, 0
        %s259 = scalar_select %p258, %s28, 0
        %p260 = scmp.lt.s32.totalorder %s259, 0
        %s261 = scalar_select %p260, %s259, 0
        %s262 = scalar_lea.vmem %s2, %s261
        %p263 = pneg %p116
        %p264 = pneg %p113
        %p265 = pneg %p150
        %p266 = pneg %p147
        %s267 = sand.u32 %s137, 1
        %s268 = scalar_lea.sflag [#allocation7], %s267
        %s269 = sand.u32 %s137, 1
        %s270 = smul.addr %s269, 8
        %s271 = scalar_lea.vmem [#allocation10], %s270
        %p272 = scmp.lt.s32.totalorder %s28, 0
        %s273 = scalar_select %p272, %s28, 0
        %p274 = scmp.lt.s32.totalorder %s28, 0
        %s275 = scalar_select %p274, %s28, 0
        %p276 = scmp.lt.s32.totalorder %s275, 0
        %s277 = scalar_select %p276, %s275, 0
        %s278 = scalar_lea.vmem %s2, %s277
        %p279 = scmp.lt.s32.totalorder %s28, 0
        %s280 = scalar_select %p279, %s28, 0
        %s281 = ssub.s32 %s28, 1
        %p282 = scmp.gt.s32.totalorder %s281, 0
        %s283 = scalar_select %p282, %s281, 0
        %p284 = scmp.eq.s32.totalorder %s28, 0
        // Predicated region
        $region41: #{generator_forward.1} parent=31 // pred_check
          %p285 = pneg %p284
        $region42: #{generator_forward.1} parent=31 // pred_check_branch
          %287 = sbr.rel (%p285) target = $region44
        $region43: #{generator_forward.1} parent=31 // pred_region
          %vm288 = vcmask 7168
          %289 = vst.msk [vmem:[#allocation3] sm:$0xff] %vm288, -inf
          %290 = vst.msk [vmem:[#allocation4] sm:$0xff] %vm288, 0.0
        $region44: #{generator_forward.1} parent=31 // pred_fallthru
          _
        %p291 = scmp.lt.s32.totalorder %s28, 1
        // Predicated region
        $region45: #{generator_forward.1} parent=31 // pred_check
          %p292 = pneg %p291
        $region46: #{generator_forward.1} parent=31 // pred_check_branch
          %294 = sbr.rel (%p292) target = $region48
        $region47: #{generator_forward.1} parent=31 // pred_region
          %v295 = vld [vmem:[%s230] sm:$0xff]
          %v296 = vld [vmem:[%s239] sm:$0xff]
          %v297 = vld [vmem:[%s239 + $0x8] sm:$0xff]
          %v298 = vld [vmem:[%s239 + $0x10] sm:$0xff]
          %v299 = vld [vmem:[%s239 + $0x18] sm:$0xff]
          %v300 = vld [vmem:[%s278] sm:$0x1]
          %v302 = vlaneseq
          %v303 = vshrl.u32 %v302, 7
          %v304 = vsub.s32 0, %v303
          %v305 = vrot.slane %v300, %v304
          %vm307 = vcmask 261120
          %v309 = vsel %vm307, %v295, 0
          %311 = vmatprep.subr.mxu0 0.0
          %312 = vmatpush1.msra.mxu0 %v296
          %313 = vmatprep.subr.mxu0 0.0
          %314 = vmatpush1.msra.mxu0 %v297
          %315 = vmatprep.subr.mxu0 0.0
          %316 = vmatpush1.msra.mxu0 %v298
          %317 = vmatprep.subr.mxu0 0.0
          %318 = vmatpush1.msra.mxu0 %v299
          %319 = vmatprep.subr.mxu0 0.0
          %320 = vmatpush1.msra.mxu0 0.0
          %321 = vmatprep.subr.mxu0 0.0
          %322 = vmatpush1.msra.mxu0 0.0
          %323 = vmatprep.subr.mxu0 0.0
          %324 = vmatpush1.msra.mxu0 0.0
          %325 = vmatprep.subr.mxu0 0.0
          %326 = vmatpush1.msra.mxu0 0.0
          %327 = vmatprep.subr.mxu0 0.0
          %328 = vmatpush1.msra.mxu0 0.0
          %329 = vmatprep.subr.mxu0 0.0
          %330 = vmatpush1.msra.mxu0 0.0
          %331 = vmatprep.subr.mxu0 0.0
          %332 = vmatpush1.msra.mxu0 0.0
          %333 = vmatprep.subr.mxu0 0.0
          %334 = vmatpush1.msra.mxu0 0.0
          %335 = vmatprep.subr.mxu0 0.0
          %336 = vmatpush1.msra.mxu0 0.0
          %337 = vmatprep.subr.mxu0 0.0
          %338 = vmatpush1.msra.mxu0 0.0
          %339 = vmatprep.subr.mxu0 0.0
          %340 = vmatpush1.msra.mxu0 0.0
          %341 = vmatprep.subr.mxu0 0.0
          %342 = vmatpush1.msra.mxu0 0.0
          %343 = vmatprep.subr.mxu0 0.0
          %344 = vmatpush1.msra.mxu0 0.0
          %345 = vmatprep.subr.mxu0 0.0
          %346 = vmatpush1.msra.mxu0 0.0
          %347 = vmatprep.subr.mxu0 0.0
          %348 = vmatpush1.msra.mxu0 0.0
          %349 = vmatprep.subr.mxu0 0.0
          %350 = vmatpush1.msra.mxu0 0.0
          %351 = vmatprep.subr.mxu0 0.0
          %352 = vmatpush1.msra.mxu0 0.0
          %353 = vmatprep.subr.mxu0 0.0
          %354 = vmatpush1.msra.mxu0 0.0
          %355 = vmatprep.subr.mxu0 0.0
          %356 = vmatpush1.msra.mxu0 0.0
          %357 = vmatprep.subr.mxu0 0.0
          %358 = vmatpush1.msra.mxu0 0.0
          %359 = vmatprep.subr.mxu0 0.0
          %360 = vmatpush1.msra.mxu0 0.0
          %361 = vmatprep.subr.mxu0 0.0
          %362 = vmatpush1.msra.mxu0 0.0
          %363 = vmatprep.subr.mxu0 0.0
          %364 = vmatpush1.msra.mxu0 0.0
          %365 = vmatprep.subr.mxu0 0.0
          %366 = vmatpush1.msra.mxu0 0.0
          %367 = vmatprep.subr.mxu0 0.0
          %368 = vmatpush1.msra.mxu0 0.0
          %369 = vmatprep.subr.mxu0 0.0
          %370 = vmatpush1.msra.mxu0 0.0
          %371 = vmatprep.subr.mxu0 0.0
          %372 = vmatpush1.msra.mxu0 0.0
          %373 = vmatprep.subr.mxu0 0.0
          %374 = vmatpush1.msra.mxu0 0.0
          %375 = vmatprep.mubr.f32.mxu0 0.0
          %376 = vmatmul.mubr.f32.gmra.mrb[0].mxu0 %v309
          %v377 = vpop.f32.mrb[0].mxu0
          %v378 = vadd.f32 %v305, %v377
          %v379 = vpop.f32.mrb[0].mxu0
          %380 = vdwg.mxu0
          %s381 = smul.u32 %s28, 8
          %s382 = scalar_lea.vmem [#allocation2], %s381
          %383 = vst [vmem:[%s382] sm:$0xff] %v378
          %v384 = vld [vmem:[#allocation3] sm:$0xff]
          %385 = vmax.xlane.f32.xlu0 %v378
          %v386 = vpop.xlane.xlu0 %385
          %v387 = vmax.f32 %v384, %v386
          %v388 = vld [vmem:[#allocation4] sm:$0xff]
          %v389 = vsub.f32 %v384, %v387
          %v390 = vmul.f32 %v389, 1.442695
          %v391 = vpow.pop %v390
          %v392 = vmul.f32 %v388, %v391
          %394 = vset.pattern.permute.xlu0 0
          %395 = vperm.xlu0 %394, %v387
          %v396 = vpop.permute.xlu0 %395
          %v398 = vsub.f32 %v378, %v396
          %v399 = vmul.f32 %v398, 1.442695
          %v400 = vpow.pop %v399
          %401 = vadd.xlane.f32.xlu0 %v400
          %v402 = vpop.xlane.xlu0 %401
          %v403 = vadd.f32 %v392, %v402
          %vm404 = vcmask 7168
          %405 = vst.msk [vmem:[#allocation4] sm:$0xff] %vm404, %v403
          %406 = vst.msk [vmem:[#allocation3] sm:$0xff] %vm404, %v387
        $region48: #{generator_forward.1} parent=31 // pred_fallthru
          _
        %p407 = scmp.ge.s32.totalorder %s28, 1
        // Predicated region
        $region49: #{generator_forward.1} parent=31 // pred_check
          %p408 = pneg %p407
        $region50: #{generator_forward.1} parent=31 // pred_check_branch
          %410 = sbr.rel (%p408) target = $region52
        $region51: #{generator_forward.1} parent=31 // pred_region
          %v411 = vld [vmem:[#allocation3] sm:$0xff]
          %v412 = vld [vmem:[#allocation4] sm:$0xff]
          %v413 = vlog2.pop %v412
          %v414 = vmul.f32 %v413, 0.6931472
          %v415 = vadd.f32 %v411, %v414
          %s416 = ssub.s32 %s28, 1
          %s417 = smul.u32 %s416, 8
          %s418 = scalar_lea.vmem [#allocation2], %s417
          %v419 = vld [vmem:[%s418] sm:$0xff]
          %421 = vset.pattern.permute.xlu0 0
          %422 = vperm.xlu0 %421, %v415
          %v423 = vpop.permute.xlu0 %422
          %v425 = vsub.f32 %v419, %v423
          %426 = vst [vmem:[%s271] sm:$0xff] %v425
        $region52: #{generator_forward.1} parent=31 // pred_fallthru
          _
        %s427 = sand.u32 %s137, 1
        %s428 = scalar_lea.sflag [#allocation7], %s427
        %s429 = sand.u32 %s137, 1
        %s430 = smul.addr %s429, 8
        %s431 = scalar_lea.vmem [#allocation10], %s430
        // Predicated region
        $region53: #{generator_forward.1} parent=31 // pred_check
          %p432 = pneg %p147
        $region54: #{generator_forward.1} parent=31 // pred_check_branch
          %434 = sbr.rel (%p432) target = $region56
        $region55: #{generator_forward.1} parent=31 // pred_region
          %s435 = ssub.s32 %s28, 1
          %p436 = scmp.gt.s32.totalorder %s435, 0
          %s437 = scalar_select %p436, %s435, 0
          %s439 = ssub.s32 128, 128
          %440 = vsyncadd %s428, %s439
          %s441 = sadd.s32 %s437, %s27
          %s442 = smul.addr %s441, 128
          %s443 = scalar_lea.hbm %s3, %s442
          %s445 = sshll.u32 %s431, 4
          %s446 = int_to_ptr.vmem [resolvable:$true] %s445
          %448 = dma.vmem_to_hbm [thread:$0]  %s446, 128, %s443, %s428
        $region56: #{generator_forward.1} parent=31 // pred_fallthru
          _
      $region32: #{generator_forward.1} parent=5 // pred_fallthru
        _
      %p449 = scmp.le.s32.totalorder 2, %s18
      // Predicated region
      $region57: #{generator_forward.1} parent=5 // pred_check
        %p450 = pneg %p449
      $region58: #{generator_forward.1} parent=5 // pred_check_branch
        %452 = sbr.rel (%p450) target = $region60
      $region59: #{generator_forward.1} parent=5 // pred_region
        %s453 = ssub.s32 %s18, 2
        // Predicated region
        $region61: #{generator_forward.1} parent=59 // pred_check
          %p454 = pneg %p153
        $region62: #{generator_forward.1} parent=59 // pred_check_branch
          %456 = sbr.rel (%p454) target = $region64
        $region63: #{generator_forward.1} parent=59 // pred_region
          %s457 = sand.u32 %s138, 1
          %s458 = scalar_lea.sflag [#allocation7], %s457
          %s459 = sand.u32 %s138, 1
          %s460 = smul.addr %s459, 8
          %s461 = scalar_lea.vmem [#allocation10], %s460
          %462 = dma.done %s458, 128
        $region64: #{generator_forward.1} parent=59 // pred_fallthru
          _
      $region60: #{generator_forward.1} parent=5 // pred_fallthru
        _
    $region6: #{generator_forward.1} parent=1 // loop_footer
      %s22 = sadd.s32 1, %s18
    $region7: #{generator_forward.1} parent=1 // loop_footer_branch
      %17 = sbr.rel target = $region3
    $region8: #{generator_forward.1} parent=1 // loop_exit
      _
    %463 = vsyncpa [#allocation6], 1
    %s464 = scalar_lea.sflag [#allocation6], 1
    %465 = vsyncpa %s464, 1
    %466 = vsyncpa [#allocation9], 1
    %s467 = scalar_lea.sflag [#allocation9], 1
    %468 = vsyncpa %s467, 1
    %469 = vsyncpa [#allocation7], 1
    %s470 = scalar_lea.sflag [#allocation7], 1
    %471 = vsyncpa %s470, 1

</llo_original>
